<compile_context>
chip_gen: v6e
topology: v6e:2x2x1
jax: 0.10.0
libtpu: 0.0.40
codegen_flags: <defaults>
</compile_context>

<pallas_src>
import functools
import math

import jax
import jax.numpy as jnp
from jax.experimental import pallas as pl
from jax.experimental.pallas import tpu as pltpu


def _layer_norm(x, g, b, eps):
    # x: (N, D) f32, g/b: (1, D).  Matches torch.nn.LayerNorm (biased variance).
    mu = jnp.mean(x, axis=-1, keepdims=True)
    var = jnp.mean(jnp.square(x - mu), axis=-1, keepdims=True)
    return (x - mu) * jax.lax.rsqrt(var + eps) * g + b


def _gelu(x, approx=True):
    if approx:
        # tanh approximation: EUP tanh instead of a multi-op erf VPU polynomial
        # over the (rows, I) intermediate (largest elementwise tensor here).
        c = math.sqrt(2.0 / math.pi)
        return 0.5 * x * (1.0 + jnp.tanh(c * (x + 0.044715 * x * x * x)))
    return 0.5 * x * (1.0 + jax.lax.erf(x * (1.0 / math.sqrt(2.0))))


def _vmem_cap_bytes():
    try:
        return int(pltpu.get_tpu_info().vmem_capacity_bytes)
    except Exception:
        return 64 * 1024 * 1024  # conservative: v7x per-TC physical VMEM


# --------------------------------------------------------------------------- #
# MoE router / position-selector kernel (BertPoPuMultiEncoder gating).         #
# Gridded over batch: one (1, S, D) hidden block per step.                     #
# --------------------------------------------------------------------------- #
def _popu_router_kernel(h_ref, am_ref, wr_ref, br_ref, mp_ref, rand_ref,
                        sel_ref, *, tau):
    x = h_ref[...].astype(jnp.float32)                           # (1, S, D)
    am = am_ref[...]                                             # (1, 1, S) additive mask
    sample_mask = (am[:, 0, :] == 0.0).astype(jnp.float32)       # (1, S)
    denom = jnp.sum(sample_mask, axis=-1, keepdims=True) + 1e-8  # (1, 1)
    emb = jnp.sum(x * sample_mask[:, :, None], axis=1) / denom   # (1, D)

    preds = jnp.dot(emb, wr_ref[...],
                    preferred_element_type=jnp.float32) + br_ref[...]   # (1, M)
    probs = jax.nn.softmax(preds, axis=-1)                               # (1, M)

    mp = mp_ref[...]                                             # (M, L, S)
    selected = jnp.zeros(sel_ref.shape, jnp.float32)             # (1, L, S)
    for m in range(mp.shape[0]):                                 # tiny static loop (n_moe ~ 3)
        selected = selected + probs[:, m:m + 1][:, :, None] * mp[m]

    # Eval branch of get_batched_gumbel_sigmoid: hard threshold (straight-through
    # forward value), column 0 replaced by uniform random (torch.rand).
    hard = (jax.nn.sigmoid(selected / tau) > 0.5).astype(jnp.float32)
    col = jax.lax.broadcasted_iota(jnp.int32, hard.shape, 2)
    sel_ref[...] = jnp.where(col == 0, rand_ref[...], hard)


def popu_position_selector(hidden, amask3, wr, br, mask_params, rand0, *, tau):
    B, S, D = hidden.shape
    n_moe, L, _ = mask_params.shape
    mp_s = mask_params[:, :, :S]       # only the first S of the 512 positions are used

    def resident(arr):
        nd = arr.ndim
        return pl.BlockSpec(arr.shape, lambda b, _nd=nd: (0,) * _nd)

    in_specs = [
        pl.BlockSpec((1, S, D), lambda b: (b, 0, 0)),
        pl.BlockSpec((1, 1, S), lambda b: (b, 0, 0)),
        resident(wr), resident(br), resident(mp_s),
        pl.BlockSpec((1, L, 1), lambda b: (b, 0, 0)),
    ]
    return pl.pallas_call(
        functools.partial(_popu_router_kernel, tau=tau),
        grid=(B,),
        out_shape=jax.ShapeDtypeStruct((B, L, S), jnp.float32),
        in_specs=in_specs,
        out_specs=pl.BlockSpec((1, L, S), lambda b: (b, 0, 0)),
        compiler_params=pltpu.CompilerParams(dimension_semantics=("parallel",)),
    )(hidden, amask3, wr, br, mp_s, rand0)


# --------------------------------------------------------------------------- #
# Fused multi-layer BertLayer kernel, grid = (B/bt, L); hidden carried in VMEM #
# across the layer axis; per-layer weight blocks prefetched by the pipeline.   #
# --------------------------------------------------------------------------- #
def _bert_popu_fused_kernel(
        h_ref, am_ref, sel_ref,
        wq_ref, bq_ref, wk_ref, bk_ref, wv_ref, bv_ref,
        wo_ref, bo_ref, g1_ref, b1_ref,
        wi_ref, bi_ref, wo2_ref, bo2_ref, g2_ref, b2_ref,
        out_ref, hstate_ref, *, num_heads, ln_eps, q_tile):
    l = pl.program_id(1)

    @pl.when(l == 0)
    def _():                                            # load the batch block once per b
        hstate_ref[...] = h_ref[...].astype(jnp.float32)

    bt, S, D = hstate_ref.shape
    H = num_heads
    dh = D // H

    x = hstate_ref[...]                                 # (bt, S, D) f32, layer input
    xf = x.reshape(bt * S, D).astype(jnp.bfloat16)

    # QKV projections: bf16 MXU inputs, f32 accumulation; 1/sqrt(dh) folded into q.
    q = jnp.dot(xf, wq_ref[0], preferred_element_type=jnp.float32) + bq_ref[0]
    k = jnp.dot(xf, wk_ref[0], preferred_element_type=jnp.float32) + bk_ref[0]
    v = jnp.dot(xf, wv_ref[0], preferred_element_type=jnp.float32) + bv_ref[0]
    q = q * (1.0 / math.sqrt(dh))

    def heads(t):                                       # (bt*S, D) -> (bt*H, S, dh) bf16
        return (t.reshape(bt, S, H, dh)
                 .transpose(0, 2, 1, 3)
                 .reshape(bt * H, S, dh)
                 .astype(jnp.bfloat16))

    qh, kh, vh = heads(q), heads(k), heads(v)

    # Additive extended attention mask broadcast over heads: (bt*H, 1, S).
    amb = jnp.broadcast_to(am_ref[...][:, None, :, :],
                           (bt, H, 1, S)).reshape(bt * H, 1, S)
    sel = jnp.squeeze(sel_ref[...], axis=1)             # (bt, S, 1)

    # Query-block tiling: bounds scores/exp scratch to O(bt*H*tq*S); everything
    # downstream of the scores is row-wise and done per tile.
    for qs in range(0, S, q_tile):
        qe = min(qs + q_tile, S)
        tq = qe - qs

        s_t = jnp.einsum('hqd,hkd->hqk', qh[:, qs:qe, :], kh,
                         preferred_element_type=jnp.float32) + amb   # (bt*H, tq, S)
        # Standard softmax (positional_mask path of BertSelfAttention), f32.
        m = jnp.max(s_t, axis=-1, keepdims=True)
        e = jnp.exp(s_t - m)
        p = e * pl.reciprocal(jnp.sum(e, axis=-1, keepdims=True), approx=True)

        ctx = jnp.einsum('hqk,hkd->hqd', p.astype(jnp.bfloat16), vh,
                         preferred_element_type=jnp.float32)         # (bt*H, tq, dh)
        ctx = (ctx.reshape(bt, H, tq, dh)
                  .transpose(0, 2, 1, 3)
                  .reshape(bt * tq, D))

        x_t = x[:, qs:qe, :].reshape(bt * tq, D)        # residual rows (old hidden)

        # BertSelfOutput: dense + residual + LayerNorm (dropout = identity).
        attn = jnp.dot(ctx.astype(jnp.bfloat16), wo_ref[0],
                       preferred_element_type=jnp.float32) + bo_ref[0]
        h1 = _layer_norm(attn + x_t, g1_ref[0], b1_ref[0], ln_eps)

        # BertIntermediate (tanh-approx GELU) + BertOutput.
        inter = jnp.dot(h1.astype(jnp.bfloat16), wi_ref[0],
                        preferred_element_type=jnp.float32) + bi_ref[0]
        inter = _gelu(inter, approx=True)
        ffn = jnp.dot(inter.astype(jnp.bfloat16), wo2_ref[0],
                      preferred_element_type=jnp.float32) + bo2_ref[0]
        h2 = _layer_norm(ffn + h1, g2_ref[0], b2_ref[0], ln_eps)     # (bt*tq, D)

        # Positional-selector residual mix (encoder loop, dense `not is_eval` branch).
        sel_t = sel[:, qs:qe, :]                                      # (bt, tq, 1)
        mix = h2.reshape(bt, tq, D) * sel_t + x[:, qs:qe, :] * (1.0 - sel_t)
        hstate_ref[:, qs:qe, :] = mix

    @pl.when(l == pl.num_programs(1) - 1)
    def _():
        out_ref[...] = hstate_ref[...].astype(out_ref.dtype)


def _fused_vmem_bytes(bt, tq, S, D, I, H):
    per_layer_w = (4 * D * D + 2 * D * I) * 2 + (8 * D + I) * 4
    w = 2 * per_layer_w                        # double-buffered (layer l+1 prefetch)
    io = 2 * 2 * bt * S * D * 4                # hidden in + out blocks, double-buffered
    state = bt * S * D * 4                     # carried hidden scratch
    qkv = 3 * bt * S * D * (4 + 2)             # f32 projections + bf16 head copies
    attn = 3 * bt * H * tq * S * 4             # scores / exp / probs for one query tile
    rows = bt * tq
    ffn = 2 * rows * I * 4 + 6 * rows * D * 4  # intermediate / gelu / row-wise temps
    return w + io + state + qkv + attn + ffn


def _choose_tiling(B, S, D, I, H, budget):
    for bt in (4, 2, 1):
        if B % bt:
            continue
        tq = min(S, 256)
        while tq > 64 and _fused_vmem_bytes(bt, tq, S, D, I, H) > budget:
            tq = max(64, tq // 2)
        if _fused_vmem_bytes(bt, tq, S, D, I, H) <= budget:
            return bt, tq
    return 1, min(S, 64)


def bert_popu_encoder_layers(hidden, amask3, sel4, params, *, num_heads, ln_eps):
    """All L BertLayers in a single pallas_call, grid = (B/bt, L)."""
    B, S, D = hidden.shape
    L = params['wq'].shape[0]
    I = params['wi'].shape[2]

    cap = _vmem_cap_bytes()
    bt, q_tile = _choose_tiling(B, S, D, I, num_heads, int(0.75 * cap))
    est = _fused_vmem_bytes(bt, q_tile, S, D, I, num_heads)
    vmem_limit = int(min(0.9 * cap, max(1.5 * est, 32 * 1024 * 1024)))

    def act_spec(block):
        nd = len(block)
        return pl.BlockSpec(block, lambda b, l, _nd=nd: (b,) + (0,) * (_nd - 1))

    def weight_spec(arr):
        block = (1,) + arr.shape[1:]
        nd = len(block)
        return pl.BlockSpec(block, lambda b, l, _nd=nd: (l,) + (0,) * (_nd - 1))

    weight_keys = ('wq', 'bq', 'wk', 'bk', 'wv', 'bv', 'wo', 'bo', 'g1', 'b1',
                   'wi', 'bi', 'wo2', 'bo2', 'g2', 'b2')
    weights = [params[k] for k in weight_keys]

    in_specs = [act_spec((bt, S, D)),
                act_spec((bt, 1, S)),
                pl.BlockSpec((bt, 1, S, 1), lambda b, l: (b, l, 0, 0))]
    in_specs += [weight_spec(w) for w in weights]

    kernel = functools.partial(_bert_popu_fused_kernel,
                               num_heads=num_heads, ln_eps=ln_eps, q_tile=q_tile)
    return pl.pallas_call(
        kernel,
        grid=(B // bt, L),
        out_shape=jax.ShapeDtypeStruct((B, S, D), jnp.float32),
        in_specs=in_specs,
        out_specs=act_spec((bt, S, D)),
        scratch_shapes=[pltpu.VMEM((bt, S, D), jnp.float32)],
        compiler_params=pltpu.CompilerParams(
            dimension_semantics=("parallel", "arbitrary"),
            vmem_limit_bytes=vmem_limit),
    )(hidden, amask3, sel4, *weights)


def bert_popu_multi_encoder(hidden, ext_attention_mask, params, router_params,
                            mask_params, rng_key, *, num_heads, ln_eps=1e-12,
                            tau=0.33, full_pos=False):
    """Pallas implementation of BertPoPuMultiEncoder.forward
    (eval-mode, is_eval=False dense branch, no cache / cross-attention)."""
    B, S, D = hidden.shape
    L = params['wq'].shape[0]
    amask3 = ext_attention_mask.reshape(B, 1, S).astype(jnp.float32)

    # Column 0 of the position selector is torch.rand(...) in the eval path of
    # get_batched_gumbel_sigmoid; drawn deterministically from rng_key here.
    rand0 = jax.random.uniform(rng_key, (B, L, 1), dtype=jnp.float32)
    all_selector = popu_position_selector(
        hidden, amask3, router_params['wr'], router_params['br'],
        mask_params, rand0, tau=tau)                          # (B, L, S)
    if full_pos:
        all_selector = jnp.ones_like(all_selector)

    out = bert_popu_encoder_layers(
        hidden, amask3, all_selector[..., None], params,
        num_heads=num_heads, ln_eps=ln_eps)

    all_pos_masks = [all_selector[:, i, :] for i in range(L)]
    return out, all_pos_masks


def init_params(key, num_layers, hidden, intermediate, n_moe):
    s = 0.02
    wdt = jnp.bfloat16     # weights stored bf16 (halves HBM/VMEM, MXU-native)
    ks = jax.random.split(key, 6)

    def w(k, shape):
        return (jax.random.normal(k, (num_layers,) + shape, jnp.float32) * s).astype(wdt)

    def zeros(d):
        return jnp.zeros((num_layers, 1, d), jnp.float32)

    params = dict(
        wq=w(ks[0], (hidden, hidden)), bq=zeros(hidden),
        wk=w(ks[1], (hidden, hidden)), bk=zeros(hidden),
        wv=w(ks[2], (hidden, hidden)), bv=zeros(hidden),
        wo=w(ks[3], (hidden, hidden)), bo=zeros(hidden),
        g1=jnp.ones((num_layers, 1, hidden), jnp.float32), b1=zeros(hidden),
        wi=w(ks[4], (hidden, intermediate)), bi=zeros(intermediate),
        wo2=w(ks[5], (intermediate, hidden)), bo2=zeros(hidden),
        g2=jnp.ones((num_layers, 1, hidden), jnp.float32), b2=zeros(hidden),
    )
    kr = jax.random.fold_in(key, 10_000)
    router = dict(
        wr=jax.random.normal(kr, (hidden, n_moe), jnp.float32) * s,
        br=jnp.zeros((1, n_moe), jnp.float32),
    )
    # nn.Parameter(torch.ones(n_moe, num_layers, 512) * 3)
    mask_params = jnp.ones((n_moe, num_layers, 512), jnp.float32) * 3.0
    return params, router, mask_params


if __name__ == "__main__":
    B, S, D, H, I, L, M = 2, 128, 128, 4, 256, 2, 3
    key = jax.random.PRNGKey(0)
    k_in, k_par, k_rand = jax.random.split(key, 3)
    hidden_states = jax.random.normal(k_in, (B, S, D), jnp.float32)

    # HF-style extended attention mask: 0.0 = attend, -10000.0 = masked.
    lengths = jnp.array([[S], [S - 16]], jnp.int32)            # (B, 1)
    valid = jnp.arange(S, dtype=jnp.int32)[None, :] < lengths  # (B, S)
    ext_mask = jnp.where(valid, 0.0, -10000.0).astype(jnp.float32)

    layer_params, router_params, mask_params = init_params(k_par, L, D, I, M)

    last_hidden, pos_masks = bert_popu_multi_encoder(
        hidden_states, ext_mask, layer_params, router_params, mask_params,
        k_rand, num_heads=H)

    jax.block_until_ready(last_hidden)
    jax.block_until_ready(pos_masks[-1])
    assert last_hidden.shape == (B, S, D)
    assert pos_masks[-1].shape == (B, S)
    assert bool(jnp.all(jnp.isfinite(last_hidden)))
    print("KERNEL_OK")
</pallas_src>

<mosaic_0001>
module attributes {stable_mosaic.version = 11 : i64} {
  func.func @_popu_router_kernel(%arg0: i32, %arg1: memref<1x128x128xf32, #tpu.memory_space<vmem>>, %arg2: memref<1x1x128xf32, #tpu.memory_space<vmem>>, %arg3: memref<128x3xf32, #tpu.memory_space<vmem>>, %arg4: memref<1x3xf32, #tpu.memory_space<vmem>>, %arg5: memref<3x2x128xf32, #tpu.memory_space<vmem>>, %arg6: memref<1x2x1xf32, #tpu.memory_space<vmem>>, %arg7: memref<1x2x128xf32, #tpu.memory_space<vmem>>) attributes {dimension_semantics = [#tpu.dimension_semantics<parallel>], iteration_bounds = array<i64: 2>, scalar_prefetch = 0 : i64, scratch_operands = 0 : i64, tpu.core_type = #tpu.core_type<tc>, window_params = [{transform_indices = @transform_0, window_bounds = array<i64: 1, 128, 128>}, {transform_indices = @transform_1, window_bounds = array<i64: 1, 1, 128>}, {pipeline_mode = #tpu.pipeline_mode<synchronous>, transform_indices = @transform_2, window_bounds = array<i64: 128, 3>}, {pipeline_mode = #tpu.pipeline_mode<synchronous>, transform_indices = @transform_3, window_bounds = array<i64: 1, 3>}, {pipeline_mode = #tpu.pipeline_mode<synchronous>, transform_indices = @transform_4, window_bounds = array<i64: 3, 2, 128>}, {transform_indices = @transform_5, window_bounds = array<i64: 1, 2, 1>}, {transform_indices = @transform_6, window_bounds = array<i64: 1, 2, 128>}]} {
    %c0 = arith.constant 0 : index
    %c0_0 = arith.constant 0 : index
    %c0_1 = arith.constant 0 : index
    %0 = vector.load %arg1[%c0, %c0_0, %c0_1] : memref<1x128x128xf32, #tpu.memory_space<vmem>>, vector<1x128x128xf32>
    %c0_2 = arith.constant 0 : index
    %c0_3 = arith.constant 0 : index
    %c0_4 = arith.constant 0 : index
    %1 = vector.load %arg2[%c0_2, %c0_3, %c0_4] : memref<1x1x128xf32, #tpu.memory_space<vmem>>, vector<1x1x128xf32>
    %2 = vector.shape_cast %1 : vector<1x1x128xf32> to vector<1x128xf32>
    %cst = arith.constant 0.000000e+00 : f32
    %3 = vector.broadcast %cst : f32 to vector<1x128xf32>
    %4 = arith.cmpf oeq, %2, %3 : vector<1x128xf32>
    %5 = arith.extui %4 : vector<1x128xi1> to vector<1x128xi32>
    %6 = arith.sitofp %5 : vector<1x128xi32> to vector<1x128xf32>
    %cst_5 = arith.constant dense<0.000000e+00> : vector<1xf32>
    %7 = vector.multi_reduction <add>, %6, %cst_5 [1] : vector<1x128xf32> to vector<1xf32>
    %8 = vector.shape_cast %7 : vector<1xf32> to vector<1x1xf32>
    %cst_6 = arith.constant 9.99999993E-9 : f32
    %9 = vector.broadcast %cst_6 : f32 to vector<1x1xf32>
    %10 = arith.addf %8, %9 : vector<1x1xf32>
    %11 = vector.shape_cast %6 : vector<1x128xf32> to vector<1x128x1xf32>
    %12 = vector.broadcast %11 : vector<1x128x1xf32> to vector<1x128x128xf32>
    %13 = arith.mulf %0, %12 : vector<1x128x128xf32>
    %cst_7 = arith.constant dense<0.000000e+00> : vector<1x128xf32>
    %14 = vector.multi_reduction <add>, %13, %cst_7 [1] : vector<1x128x128xf32> to vector<1x128xf32>
    %15 = vector.broadcast %10 : vector<1x1xf32> to vector<1x128xf32>
    %16 = arith.divf %14, %15 : vector<1x128xf32>
    %c0_8 = arith.constant 0 : index
    %c0_9 = arith.constant 0 : index
    %17 = vector.load %arg3[%c0_8, %c0_9] : memref<128x3xf32, #tpu.memory_space<vmem>>, vector<128x3xf32>
    %cst_10 = arith.constant dense<0.000000e+00> : vector<1x3xf32>
    %18 = tpu.matmul %16, %17, %cst_10 {dimension_numbers = #tpu.dot_dimension_numbers<[1], [0], [0], [1], [0, 0, 1, 1], [], []>} : vector<1x128xf32>, vector<128x3xf32>, vector<1x3xf32> -> vector<1x3xf32>
    %c0_11 = arith.constant 0 : index
    %c0_12 = arith.constant 0 : index
    %19 = vector.load %arg4[%c0_11, %c0_12] : memref<1x3xf32, #tpu.memory_space<vmem>>, vector<1x3xf32>
    %20 = arith.addf %18, %19 : vector<1x3xf32>
    %cst_13 = arith.constant dense<0xFF800000> : vector<1xf32>
    %21 = vector.multi_reduction <maximumf>, %20, %cst_13 [1] : vector<1x3xf32> to vector<1xf32>
    %cst_14 = arith.constant 0xFF800000 : f32
    %22 = vector.broadcast %cst_14 : f32 to vector<1xf32>
    %23 = arith.maximumf %22, %21 : vector<1xf32>
    %24 = vector.shape_cast %23 : vector<1xf32> to vector<1x1xf32>
    %25 = vector.broadcast %24 : vector<1x1xf32> to vector<1x3xf32>
    %26 = arith.subf %20, %25 : vector<1x3xf32>
    %27 = math.exp %26 : vector<1x3xf32>
    %cst_15 = arith.constant dense<0.000000e+00> : vector<1xf32>
    %28 = vector.multi_reduction <add>, %27, %cst_15 [1] : vector<1x3xf32> to vector<1xf32>
    %29 = vector.shape_cast %28 : vector<1xf32> to vector<1x1xf32>
    %30 = vector.broadcast %29 : vector<1x1xf32> to vector<1x3xf32>
    %31 = arith.divf %27, %30 : vector<1x3xf32>
    %c0_16 = arith.constant 0 : index
    %c0_17 = arith.constant 0 : index
    %c0_18 = arith.constant 0 : index
    %32 = vector.load %arg5[%c0_16, %c0_17, %c0_18] : memref<3x2x128xf32, #tpu.memory_space<vmem>>, vector<3x2x128xf32>
    %cst_19 = arith.constant 0.000000e+00 : f32
    %33 = vector.broadcast %cst_19 : f32 to vector<1x2x128xf32>
    %34 = vector.extract_strided_slice %31 {offsets = [0, 0], sizes = [1, 1], strides = [1, 1]} : vector<1x3xf32> to vector<1x1xf32>
    %35 = vector.shape_cast %34 : vector<1x1xf32> to vector<1x1x1xf32>
    %36 = vector.extract_strided_slice %32 {offsets = [0, 0, 0], sizes = [1, 2, 128], strides = [1, 1, 1]} : vector<3x2x128xf32> to vector<1x2x128xf32>
    %37 = vector.shape_cast %36 : vector<1x2x128xf32> to vector<2x128xf32>
    %38 = vector.shape_cast %37 : vector<2x128xf32> to vector<1x2x128xf32>
    %39 = vector.broadcast %35 : vector<1x1x1xf32> to vector<1x2x128xf32>
    %40 = arith.mulf %39, %38 : vector<1x2x128xf32>
    %41 = arith.addf %33, %40 : vector<1x2x128xf32>
    %42 = vector.extract_strided_slice %31 {offsets = [0, 1], sizes = [1, 1], strides = [1, 1]} : vector<1x3xf32> to vector<1x1xf32>
    %43 = vector.shape_cast %42 : vector<1x1xf32> to vector<1x1x1xf32>
    %44 = vector.extract_strided_slice %32 {offsets = [1, 0, 0], sizes = [1, 2, 128], strides = [1, 1, 1]} : vector<3x2x128xf32> to vector<1x2x128xf32>
    %45 = vector.shape_cast %44 : vector<1x2x128xf32> to vector<2x128xf32>
    %46 = vector.shape_cast %45 : vector<2x128xf32> to vector<1x2x128xf32>
    %47 = vector.broadcast %43 : vector<1x1x1xf32> to vector<1x2x128xf32>
    %48 = arith.mulf %47, %46 : vector<1x2x128xf32>
    %49 = arith.addf %41, %48 : vector<1x2x128xf32>
    %50 = vector.extract_strided_slice %31 {offsets = [0, 2], sizes = [1, 1], strides = [1, 1]} : vector<1x3xf32> to vector<1x1xf32>
    %51 = vector.shape_cast %50 : vector<1x1xf32> to vector<1x1x1xf32>
    %52 = vector.extract_strided_slice %32 {offsets = [2, 0, 0], sizes = [1, 2, 128], strides = [1, 1, 1]} : vector<3x2x128xf32> to vector<1x2x128xf32>
    %53 = vector.shape_cast %52 : vector<1x2x128xf32> to vector<2x128xf32>
    %54 = vector.shape_cast %53 : vector<2x128xf32> to vector<1x2x128xf32>
    %55 = vector.broadcast %51 : vector<1x1x1xf32> to vector<1x2x128xf32>
    %56 = arith.mulf %55, %54 : vector<1x2x128xf32>
    %57 = arith.addf %49, %56 : vector<1x2x128xf32>
    %cst_20 = arith.constant 3.300000e-01 : f32
    %58 = vector.broadcast %cst_20 : f32 to vector<1x2x128xf32>
    %59 = arith.divf %57, %58 : vector<1x2x128xf32>
    %60 = arith.negf %59 : vector<1x2x128xf32>
    %61 = math.exp %60 : vector<1x2x128xf32>
    %cst_21 = arith.constant 1.000000e+00 : f32
    %62 = vector.broadcast %cst_21 : f32 to vector<1x2x128xf32>
    %63 = arith.addf %62, %61 : vector<1x2x128xf32>
    %64 = arith.divf %62, %63 : vector<1x2x128xf32>
    %cst_22 = arith.constant 5.000000e-01 : f32
    %65 = vector.broadcast %cst_22 : f32 to vector<1x2x128xf32>
    %66 = arith.cmpf ogt, %64, %65 : vector<1x2x128xf32>
    %67 = arith.extui %66 : vector<1x2x128xi1> to vector<1x2x128xi32>
    %68 = arith.sitofp %67 : vector<1x2x128xi32> to vector<1x2x128xf32>
    %69 = tpu.iota {dimensions = array<i32: 2>} : vector<1x2x128xi32>
    %c0_i32 = arith.constant 0 : i32
    %70 = vector.broadcast %c0_i32 : i32 to vector<1x2x128xi32>
    %71 = arith.cmpi eq, %69, %70 : vector<1x2x128xi32>
    %c0_23 = arith.constant 0 : index
    %c0_24 = arith.constant 0 : index
    %c0_25 = arith.constant 0 : index
    %72 = vector.load %arg6[%c0_23, %c0_24, %c0_25] : memref<1x2x1xf32, #tpu.memory_space<vmem>>, vector<1x2x1xf32>
    %73 = vector.shape_cast %72 : vector<1x2x1xf32> to vector<1x2x1xf32>
    %74 = vector.broadcast %73 : vector<1x2x1xf32> to vector<1x2x128xf32>
    %75 = arith.select %71, %74, %68 : vector<1x2x128xi1>, vector<1x2x128xf32>
    %c0_26 = arith.constant 0 : index
    %c0_27 = arith.constant 0 : index
    %c0_28 = arith.constant 0 : index
    %76 = vector.load %arg7[%c0_26, %c0_27, %c0_28] : memref<1x2x128xf32, #tpu.memory_space<vmem>>, vector<1x2x128xf32>
    tpu.vector_store %arg7[%c0_26, %c0_27, %c0_28], %75 {strides = array<i32>} : memref<1x2x128xf32, #tpu.memory_space<vmem>>, vector<1x2x128xf32>,
    return
  }
  func.func @transform_0(%arg0: i32) -> (i32, i32, i32) {
    %c0_i32 = arith.constant 0 : i32
    %c0_i32_0 = arith.constant 0 : i32
    %c0_i32_1 = arith.constant 0 : i32
    return %arg0, %c0_i32, %c0_i32_0 : i32, i32, i32
  }
  func.func @transform_1(%arg0: i32) -> (i32, i32, i32) {
    %c0_i32 = arith.constant 0 : i32
    %c0_i32_0 = arith.constant 0 : i32
    %c0_i32_1 = arith.constant 0 : i32
    return %arg0, %c0_i32, %c0_i32_0 : i32, i32, i32
  }
  func.func @transform_2(%arg0: i32) -> (i32, i32) {
    %c0_i32 = arith.constant 0 : i32
    %c0_i32_0 = arith.constant 0 : i32
    %c0_i32_1 = arith.constant 0 : i32
    return %c0_i32, %c0_i32_0 : i32, i32
  }
  func.func @transform_3(%arg0: i32) -> (i32, i32) {
    %c0_i32 = arith.constant 0 : i32
    %c0_i32_0 = arith.constant 0 : i32
    %c0_i32_1 = arith.constant 0 : i32
    return %c0_i32, %c0_i32_0 : i32, i32
  }
  func.func @transform_4(%arg0: i32) -> (i32, i32, i32) {
    %c0_i32 = arith.constant 0 : i32
    %c0_i32_0 = arith.constant 0 : i32
    %c0_i32_1 = arith.constant 0 : i32
    %c0_i32_2 = arith.constant 0 : i32
    return %c0_i32, %c0_i32_0, %c0_i32_1 : i32, i32, i32
  }
  func.func @transform_5(%arg0: i32) -> (i32, i32, i32) {
    %c0_i32 = arith.constant 0 : i32
    %c0_i32_0 = arith.constant 0 : i32
    %c0_i32_1 = arith.constant 0 : i32
    return %arg0, %c0_i32, %c0_i32_0 : i32, i32, i32
  }
  func.func @transform_6(%arg0: i32) -> (i32, i32, i32) {
    %c0_i32 = arith.constant 0 : i32
    %c0_i32_0 = arith.constant 0 : i32
    %c0_i32_1 = arith.constant 0 : i32
    return %arg0, %c0_i32, %c0_i32_0 : i32, i32, i32
  }
}

</mosaic_0001>

<llo_original>
// kernel: tpu_custom_call.1
$region0: #{tpu_custom_call.1}
  #allocation0 [shape = 'u32[]', space=smem, size = 0x4, offset = 0x4, fixed_abs, tag = 'smem constant byte address 0x4 - core index']
  #allocation1 [shape = 'u32[144,128]{1,0:T(1,128)}', space=vmem, size = 0x12000, scoped, tag = 'internal scratch']
  %s0 = inlined_call_operand.hbm [shape: f32[2,128,128], index: 0, kind: input, shape index: {}]
  %s1 = inlined_call_operand.vmem [shape: f32[2,1,128], index: 1, kind: input, shape index: {}]
  %s2 = inlined_call_operand.vmem [shape: f32[128,3], index: 2, kind: input, shape index: {}]
  %s3 = inlined_call_operand.vmem [shape: f32[1,3], index: 3, kind: input, shape index: {}]
  %s4 = inlined_call_operand.vmem [shape: f32[3,2,128], index: 4, kind: input, shape index: {}]
  %s5 = inlined_call_operand.vmem [shape: f32[2,2,1], index: 5, kind: input, shape index: {}]
  %s6 = inlined_call_operand.hbm [shape: f32[2,2,128], index: 6, kind: output, shape index: {}]
  %s7 = sld [smem:[#allocation0]]
  $region61: #{tpu_custom_call.1} parent=0
    _
  %s9 = ssub.s32 1, %s7
  %s10 = scalar_select 0, %s9, %s7
  $region1: #{tpu_custom_call.1} parent=0
    #allocation2 [shape = 'u8[131072]{0}', space=vmem, size = 0x20000, scoped, tag = 'input window, operand 0']
    #allocation3 [shape = 's32[2]{0}', space=sflag, size = 0x8, scoped, tag = 'scoped memory for tpu_custom_call.1']
    #allocation4 [shape = 's32[2]{0}', space=sflag, size = 0x8, scoped, tag = 'scoped memory for tpu_custom_call.1']
    #allocation5 [shape = 'u8[2048]{0}', space=vmem, size = 0x800, scoped, tag = 'output window, operand 0']
    %11 = vsyncpa [#allocation3], 0
    %s12 = scalar_lea.sflag [#allocation3], 1
    %13 = vsyncpa %s12, 0
    %14 = vsyncpa [#allocation4], 0
    %s15 = scalar_lea.sflag [#allocation4], 1
    %16 = vsyncpa %s15, 0
    loop: start=0, step=1, limit=4
    $region2: #{tpu_custom_call.1} parent=1 // loop_pre_header
      _
    $region3: #{tpu_custom_call.1} parent=1 // loop_header
      %s18 = sphi 0, %s22
      %p19 = scmp.ge.s32.totalorder %s18, 4
      %s28 = sphi 0, %s30
      %s31 = sphi 0, %s28
      %s32 = sphi 0, %s31
      %s48 = sphi 0, %s32
      %s54 = sphi 0, %s56
      %s57 = sphi 0, %s54
      %s58 = sphi 0, %s57
      %s74 = sphi 0, %s58
      %s78 = sphi 0, %s78
      %s80 = sphi 0, %s78
      %s81 = sphi 0, %s80
      %s95 = sphi 0, %s81
      %s99 = sphi 0, %s99
      %s101 = sphi 0, %s99
      %s102 = sphi 0, %s101
      %s116 = sphi 0, %s102
      %s120 = sphi 0, %s120
      %s122 = sphi 0, %s120
      %s123 = sphi 0, %s122
      %s137 = sphi 0, %s123
      %s143 = sphi 0, %s145
      %s146 = sphi 0, %s143
      %s147 = sphi 0, %s146
      %s163 = sphi 0, %s147
      %s169 = sphi 0, %s171
      %s172 = sphi 0, %s169
      %s173 = sphi 0, %s172
      %s189 = sphi 0, %s173
    $region4: #{tpu_custom_call.1} parent=1 // loop_header_branch
      %21 = sbr.rel (%p19) target = $region8
    $region5: #{tpu_custom_call.1} parent=1 // loop_body
      %s23 = ssub.s32 %s18, 1
      %s24 = ssub.s32 %s18, 2
      %s25 = sadd.s32 %s18, 1
      %s26 = ssub.s32 %s18, %s25
      %p27 = scmp.eq.s32.totalorder %s26, 0
      %s29 = sadd.s32 %s28, 1
      %s30 = scalar_select %p27, %s28, %s29
      %p33 = pneg %p27
      %p34 = scmp.eq.s32.totalorder %s18, 1
      %p35 = por %p33, %p34
      %p36 = scmp.ne.s32.totalorder %s28, %s31
      %p37 = scmp.eq.s32.totalorder %s18, 0
      %p38 = por %p36, %p37
      %p39 = scmp.ne.s32.totalorder %s28, %s31
      %p40 = scmp.eq.s32.totalorder %s23, 1
      %p41 = por %p39, %p40
      %p42 = scmp.ne.s32.totalorder %s31, %s32
      %p43 = scmp.eq.s32.totalorder %s23, 0
      %p44 = por %p42, %p43
      %p45 = scmp.ne.s32.totalorder %s31, %s32
      %p46 = scmp.eq.s32.totalorder %s24, 1
      %p47 = por %p45, %p46
      %p49 = scmp.ne.s32.totalorder %s32, %s48
      %p50 = scmp.eq.s32.totalorder %s24, 0
      %p51 = por %p49, %p50
      %s52 = ssub.s32 %s18, %s25
      %p53 = scmp.eq.s32.totalorder %s52, 0
      %s55 = sadd.s32 %s54, 1
      %s56 = scalar_select %p53, %s54, %s55
      %p59 = pneg %p53
      %p60 = scmp.eq.s32.totalorder %s18, 1
      %p61 = por %p59, %p60
      %p62 = scmp.ne.s32.totalorder %s54, %s57
      %p63 = scmp.eq.s32.totalorder %s18, 0
      %p64 = por %p62, %p63
      %p65 = scmp.ne.s32.totalorder %s54, %s57
      %p66 = scmp.eq.s32.totalorder %s23, 1
      %p67 = por %p65, %p66
      %p68 = scmp.ne.s32.totalorder %s57, %s58
      %p69 = scmp.eq.s32.totalorder %s23, 0
      %p70 = por %p68, %p69
      %p71 = scmp.ne.s32.totalorder %s57, %s58
      %p72 = scmp.eq.s32.totalorder %s24, 1
      %p73 = por %p71, %p72
      %p75 = scmp.ne.s32.totalorder %s58, %s74
      %p76 = scmp.eq.s32.totalorder %s24, 0
      %p77 = por %p75, %p76
      %s79 = sadd.s32 %s78, 1
      %p82 = scmp.eq.s32.totalorder %s18, 1
      %p83 = scmp.ne.s32.totalorder %s78, %s80
      %p84 = scmp.eq.s32.totalorder %s18, 0
      %p85 = por %p83, %p84
      %p86 = scmp.ne.s32.totalorder %s78, %s80
      %p87 = scmp.eq.s32.totalorder %s23, 1
      %p88 = por %p86, %p87
      %p89 = scmp.ne.s32.totalorder %s80, %s81
      %p90 = scmp.eq.s32.totalorder %s23, 0
      %p91 = por %p89, %p90
      %p92 = scmp.ne.s32.totalorder %s80, %s81
      %p93 = scmp.eq.s32.totalorder %s24, 1
      %p94 = por %p92, %p93
      %p96 = scmp.ne.s32.totalorder %s81, %s95
      %p97 = scmp.eq.s32.totalorder %s24, 0
      %p98 = por %p96, %p97
      %s100 = sadd.s32 %s99, 1
      %p103 = scmp.eq.s32.totalorder %s18, 1
      %p104 = scmp.ne.s32.totalorder %s99, %s101
      %p105 = scmp.eq.s32.totalorder %s18, 0
      %p106 = por %p104, %p105
      %p107 = scmp.ne.s32.totalorder %s99, %s101
      %p108 = scmp.eq.s32.totalorder %s23, 1
      %p109 = por %p107, %p108
      %p110 = scmp.ne.s32.totalorder %s101, %s102
      %p111 = scmp.eq.s32.totalorder %s23, 0
      %p112 = por %p110, %p111
      %p113 = scmp.ne.s32.totalorder %s101, %s102
      %p114 = scmp.eq.s32.totalorder %s24, 1
      %p115 = por %p113, %p114
      %p117 = scmp.ne.s32.totalorder %s102, %s116
      %p118 = scmp.eq.s32.totalorder %s24, 0
      %p119 = por %p117, %p118
      %s121 = sadd.s32 %s120, 1
      %p124 = scmp.eq.s32.totalorder %s18, 1
      %p125 = scmp.ne.s32.totalorder %s120, %s122
      %p126 = scmp.eq.s32.totalorder %s18, 0
      %p127 = por %p125, %p126
      %p128 = scmp.ne.s32.totalorder %s120, %s122
      %p129 = scmp.eq.s32.totalorder %s23, 1
      %p130 = por %p128, %p129
      %p131 = scmp.ne.s32.totalorder %s122, %s123
      %p132 = scmp.eq.s32.totalorder %s23, 0
      %p133 = por %p131, %p132
      %p134 = scmp.ne.s32.totalorder %s122, %s123
      %p135 = scmp.eq.s32.totalorder %s24, 1
      %p136 = por %p134, %p135
      %p138 = scmp.ne.s32.totalorder %s123, %s137
      %p139 = scmp.eq.s32.totalorder %s24, 0
      %p140 = por %p138, %p139
      %s141 = ssub.s32 %s18, %s25
      %p142 = scmp.eq.s32.totalorder %s141, 0
      %s144 = sadd.s32 %s143, 1
      %s145 = scalar_select %p142, %s143, %s144
      %p148 = pneg %p142
      %p149 = scmp.eq.s32.totalorder %s18, 1
      %p150 = por %p148, %p149
      %p151 = scmp.ne.s32.totalorder %s143, %s146
      %p152 = scmp.eq.s32.totalorder %s18, 0
      %p153 = por %p151, %p152
      %p154 = scmp.ne.s32.totalorder %s143, %s146
      %p155 = scmp.eq.s32.totalorder %s23, 1
      %p156 = por %p154, %p155
      %p157 = scmp.ne.s32.totalorder %s146, %s147
      %p158 = scmp.eq.s32.totalorder %s23, 0
      %p159 = por %p157, %p158
      %p160 = scmp.ne.s32.totalorder %s146, %s147
      %p161 = scmp.eq.s32.totalorder %s24, 1
      %p162 = por %p160, %p161
      %p164 = scmp.ne.s32.totalorder %s147, %s163
      %p165 = scmp.eq.s32.totalorder %s24, 0
      %p166 = por %p164, %p165
      %s167 = ssub.s32 %s18, %s25
      %p168 = scmp.eq.s32.totalorder %s167, 0
      %s170 = sadd.s32 %s169, 1
      %s171 = scalar_select %p168, %s169, %s170
      %p174 = pneg %p168
      %p175 = scmp.eq.s32.totalorder %s18, 1
      %p176 = por %p174, %p175
      %p177 = scmp.ne.s32.totalorder %s169, %s172
      %p178 = scmp.eq.s32.totalorder %s18, 0
      %p179 = por %p177, %p178
      %p180 = scmp.ne.s32.totalorder %s169, %s172
      %p181 = scmp.eq.s32.totalorder %s23, 1
      %p182 = por %p180, %p181
      %p183 = scmp.ne.s32.totalorder %s172, %s173
      %p184 = scmp.eq.s32.totalorder %s23, 0
      %p185 = por %p183, %p184
      %p186 = scmp.ne.s32.totalorder %s172, %s173
      %p187 = scmp.eq.s32.totalorder %s24, 1
      %p188 = por %p186, %p187
      %p190 = scmp.ne.s32.totalorder %s173, %s189
      %p191 = scmp.eq.s32.totalorder %s24, 0
      %p192 = por %p190, %p191
      %p193 = scmp.le.s32.totalorder 1, %s18
      %p194 = scmp.lt.s32.totalorder %s18, 3
      %p195 = pnand %p193, %p194
      %p196 = pneg %p195
      // Predicated region
      $region9: #{tpu_custom_call.1} parent=5 // pred_check
        _
      $region10: #{tpu_custom_call.1} parent=5 // pred_check_branch
        %198 = sbr.rel (%p195) target = $region12
      $region11: #{tpu_custom_call.1} parent=5 // pred_region
        %s199 = ssub.s32 %s18, 1
        // Predicated region
        $region13: #{tpu_custom_call.1} parent=11 // pred_check
          %p200 = pneg %p91
        $region14: #{tpu_custom_call.1} parent=11 // pred_check_branch
          %202 = sbr.rel (%p200) target = $region16
        $region15: #{tpu_custom_call.1} parent=11 // pred_region
          _
        $region16: #{tpu_custom_call.1} parent=11 // pred_fallthru
          _
        // Predicated region
        $region17: #{tpu_custom_call.1} parent=11 // pred_check
          %p203 = pneg %p112
        $region18: #{tpu_custom_call.1} parent=11 // pred_check_branch
          %205 = sbr.rel (%p203) target = $region20
        $region19: #{tpu_custom_call.1} parent=11 // pred_region
          _
        $region20: #{tpu_custom_call.1} parent=11 // pred_fallthru
          _
        // Predicated region
        $region21: #{tpu_custom_call.1} parent=11 // pred_check
          %p206 = pneg %p133
        $region22: #{tpu_custom_call.1} parent=11 // pred_check_branch
          %208 = sbr.rel (%p206) target = $region24
        $region23: #{tpu_custom_call.1} parent=11 // pred_region
          _
        $region24: #{tpu_custom_call.1} parent=11 // pred_fallthru
          _
      $region12: #{tpu_custom_call.1} parent=5 // pred_fallthru
        _
      %p209 = scmp.lt.s32.totalorder %s18, 2
      // Predicated region
      $region25: #{tpu_custom_call.1} parent=5 // pred_check
        %p210 = pneg %p209
      $region26: #{tpu_custom_call.1} parent=5 // pred_check_branch
        %212 = sbr.rel (%p210) target = $region28
      $region27: #{tpu_custom_call.1} parent=5 // pred_region
        // Predicated region
        $region29: #{tpu_custom_call.1} parent=27 // pred_check
          %p213 = pneg %p38
        $region30: #{tpu_custom_call.1} parent=27 // pred_check_branch
          %215 = sbr.rel (%p213) target = $region32
        $region31: #{tpu_custom_call.1} parent=27 // pred_region
          %s216 = sand.u32 %s28, 1
          %s217 = scalar_lea.sflag [#allocation3], %s216
          %s218 = sand.u32 %s28, 1
          %s219 = smul.addr %s218, 128
          %s220 = scalar_lea.vmem [#allocation2], %s219
          %s222 = ssub.s32 2048, 2048
          %223 = vsyncadd %s217, %s222
          %s224 = smul.addr %s18, 16
          %s225 = smul.addr %s224, 128
          %s226 = scalar_lea.hbm %s0, %s225
          %s227 = sshll.u32 %s220, 4
          %s228 = int_to_ptr.vmem [resolvable:$true] %s227
          %233 = dma.hbm_to_vmem [thread:$0]  %s226, 2048, %s228, %s217, 128, 128, 8
        $region32: #{tpu_custom_call.1} parent=27 // pred_fallthru
          _
        // Predicated region
        $region33: #{tpu_custom_call.1} parent=27 // pred_check
          %p234 = pneg %p64
        $region34: #{tpu_custom_call.1} parent=27 // pred_check_branch
          %236 = sbr.rel (%p234) target = $region36
        $region35: #{tpu_custom_call.1} parent=27 // pred_region
          %p237 = scmp.lt.s32.totalorder %s18, 1
          %s238 = scalar_select %p237, %s18, 1
          %s239 = scalar_lea.vmem %s1, %s238
        $region36: #{tpu_custom_call.1} parent=27 // pred_fallthru
          _
        // Predicated region
        $region37: #{tpu_custom_call.1} parent=27 // pred_check
          %p240 = pneg %p153
        $region38: #{tpu_custom_call.1} parent=27 // pred_check_branch
          %242 = sbr.rel (%p240) target = $region40
        $region39: #{tpu_custom_call.1} parent=27 // pred_region
          %p243 = scmp.lt.s32.totalorder %s18, 1
          %s244 = scalar_select %p243, %s18, 1
          %s245 = smul.addr %s244, 2
          %s246 = scalar_lea.vmem %s5, %s245
        $region40: #{tpu_custom_call.1} parent=27 // pred_fallthru
          _
      $region28: #{tpu_custom_call.1} parent=5 // pred_fallthru
        _
      %p247 = scmp.le.s32.totalorder 1, %s18
      %p248 = scmp.lt.s32.totalorder %s18, 3
      %p249 = pnand %p247, %p248
      %p250 = pneg %p249
      // Predicated region
      $region41: #{tpu_custom_call.1} parent=5 // pred_check
        _
      $region42: #{tpu_custom_call.1} parent=5 // pred_check_branch
        %252 = sbr.rel (%p249) target = $region44
      $region43: #{tpu_custom_call.1} parent=5 // pred_region
        %s253 = ssub.s32 %s18, 1
        %s254 = sand.u32 %s31, 1
        %s255 = scalar_lea.sflag [#allocation3], %s254
        %s256 = sand.u32 %s31, 1
        %s257 = smul.addr %s256, 128
        %s258 = scalar_lea.vmem [#allocation2], %s257
        // Predicated region
        $region45: #{tpu_custom_call.1} parent=43 // pred_check
          %p259 = pneg %p44
        $region46: #{tpu_custom_call.1} parent=43 // pred_check_branch
          %261 = sbr.rel (%p259) target = $region48
        $region47: #{tpu_custom_call.1} parent=43 // pred_region
          %262 = dma.done %s255, 2048
        $region48: #{tpu_custom_call.1} parent=43 // pred_fallthru
          _
        %s263 = sand.u32 %s31, 1
        %s264 = scalar_lea.sflag [#allocation3], %s263
        %s265 = sand.u32 %s31, 1
        %s266 = smul.addr %s265, 128
        %s267 = scalar_lea.vmem [#allocation2], %s266
        %p268 = pneg %p44
        %p269 = pneg %p41
        %p270 = scmp.lt.s32.totalorder %s23, 1
        %s271 = scalar_select %p270, %s23, 1
        %s272 = scalar_lea.vmem %s1, %s271
        %p273 = pneg %p70
        %p274 = pneg %p67
        %p275 = pneg %p91
        %p276 = pneg %p88
        %p277 = pneg %p112
        %p278 = pneg %p109
        %p279 = pneg %p133
        %p280 = pneg %p130
        %p281 = scmp.lt.s32.totalorder %s23, 1
        %s282 = scalar_select %p281, %s23, 1
        %s283 = smul.addr %s282, 2
        %s284 = scalar_lea.vmem %s5, %s283
        %p285 = pneg %p159
        %p286 = pneg %p156
        %p287 = pneg %p185
        %p288 = pneg %p182
        %s289 = sand.u32 %s172, 1
        %s290 = scalar_lea.sflag [#allocation4], %s289
        %s291 = sand.u32 %s172, 1
        %s292 = smul.addr %s291, 2
        %s293 = scalar_lea.vmem [#allocation5], %s292
        %p294 = scmp.lt.s32.totalorder %s23, 1
        %s295 = scalar_select %p294, %s23, 1
        %s296 = scalar_lea.vmem %s1, %s295
        %p297 = scmp.lt.s32.totalorder %s23, 1
        %s298 = scalar_select %p297, %s23, 1
        %s299 = smul.addr %s298, 2
        %s300 = scalar_lea.vmem %s5, %s299
        %v301 = vld [vmem:[%s258] sm:$0xff]
        %v302 = vld [vmem:[%s258 + $0x8] sm:$0xff]
        %v303 = vld [vmem:[%s258 + $0x10] sm:$0xff]
        %v304 = vld [vmem:[%s258 + $0x18] sm:$0xff]
        %v305 = vld [vmem:[%s258 + $0x20] sm:$0xff]
        %v306 = vld [vmem:[%s258 + $0x28] sm:$0xff]
        %v307 = vld [vmem:[%s258 + $0x30] sm:$0xff]
        %v308 = vld [vmem:[%s258 + $0x38] sm:$0xff]
        %v309 = vld [vmem:[%s258 + $0x40] sm:$0xff]
        %v310 = vld [vmem:[%s258 + $0x48] sm:$0xff]
        %v311 = vld [vmem:[%s258 + $0x50] sm:$0xff]
        %v312 = vld [vmem:[%s258 + $0x58] sm:$0xff]
        %v313 = vld [vmem:[%s258 + $0x60] sm:$0xff]
        %v314 = vld [vmem:[%s258 + $0x68] sm:$0xff]
        %v315 = vld [vmem:[%s258 + $0x70] sm:$0xff]
        %v316 = vld [vmem:[%s258 + $0x78] sm:$0xff]
        %v317 = vld [vmem:[%s296] sm:$0x1]
        %vm318 = vcmp.eq.f32.partialorder %v317, 0.0
        %v319 = vsel %vm318, 1, 0
        %v320 = vcvt.s32.f32 %v319
        %vm321 = vcmask 1040384
        %v322 = vsel %vm321, %v320, 0.0
        %323 = vadd.xlane.f32.xlu0 %v322
        %v324 = vpop.xlane.xlu0 %323
        %v325 = vadd.f32 %v324, 1e-08
        %v326 = vlaneseq
        %v327 = vshrl.u32 %v326, 7
        %v328 = vsub.s32 0, %v327
        %v329 = vrot.slane %v320, %v328
        %331 = vbcast.lane.b32.xlu0 %v329, 256
        %v332 = vpop.permute.xlu0 %331
        %s334 = sor.u32 256, 8
        %335 = vbcast.lane.b32.xlu0 %v329, %s334
        %v336 = vpop.permute.xlu0 %335
        %s338 = sor.u32 256, 16
        %339 = vbcast.lane.b32.xlu0 %v329, %s338
        %v340 = vpop.permute.xlu0 %339
        %s342 = sor.u32 256, 24
        %343 = vbcast.lane.b32.xlu0 %v329, %s342
        %v344 = vpop.permute.xlu0 %343
        %s346 = sor.u32 256, 32
        %347 = vbcast.lane.b32.xlu0 %v329, %s346
        %v348 = vpop.permute.xlu0 %347
        %s350 = sor.u32 256, 40
        %351 = vbcast.lane.b32.xlu0 %v329, %s350
        %v352 = vpop.permute.xlu0 %351
        %s354 = sor.u32 256, 48
        %355 = vbcast.lane.b32.xlu0 %v329, %s354
        %v356 = vpop.permute.xlu0 %355
        %s358 = sor.u32 256, 56
        %359 = vbcast.lane.b32.xlu0 %v329, %s358
        %v360 = vpop.permute.xlu0 %359
        %s362 = sor.u32 256, 64
        %363 = vbcast.lane.b32.xlu0 %v329, %s362
        %v364 = vpop.permute.xlu0 %363
        %s366 = sor.u32 256, 72
        %367 = vbcast.lane.b32.xlu0 %v329, %s366
        %v368 = vpop.permute.xlu0 %367
        %s370 = sor.u32 256, 80
        %371 = vbcast.lane.b32.xlu0 %v329, %s370
        %v372 = vpop.permute.xlu0 %371
        %s374 = sor.u32 256, 88
        %375 = vbcast.lane.b32.xlu0 %v329, %s374
        %v376 = vpop.permute.xlu0 %375
        %s378 = sor.u32 256, 96
        %379 = vbcast.lane.b32.xlu0 %v329, %s378
        %v380 = vpop.permute.xlu0 %379
        %s382 = sor.u32 256, 104
        %383 = vbcast.lane.b32.xlu0 %v329, %s382
        %v384 = vpop.permute.xlu0 %383
        %s386 = sor.u32 256, 112
        %387 = vbcast.lane.b32.xlu0 %v329, %s386
        %v388 = vpop.permute.xlu0 %387
        %s390 = sor.u32 256, 120
        %391 = vbcast.lane.b32.xlu0 %v329, %s390
        %v392 = vpop.permute.xlu0 %391
        %v393 = vmul.f32 %v301, %v332
        %v394 = vmul.f32 %v302, %v336
        %v395 = vmul.f32 %v303, %v340
        %v396 = vmul.f32 %v304, %v344
        %v397 = vmul.f32 %v305, %v348
        %v398 = vmul.f32 %v306, %v352
        %v399 = vmul.f32 %v307, %v356
        %v400 = vmul.f32 %v308, %v360
        %v401 = vmul.f32 %v309, %v364
        %v402 = vmul.f32 %v310, %v368
        %v403 = vmul.f32 %v311, %v372
        %v404 = vmul.f32 %v312, %v376
        %v405 = vmul.f32 %v313, %v380
        %v406 = vmul.f32 %v314, %v384
        %v407 = vmul.f32 %v315, %v388
        %v408 = vmul.f32 %v316, %v392
        %v409 = vadd.f32 %v393, %v394
        %v410 = vadd.f32 %v409, %v395
        %v411 = vadd.f32 %v410, %v396
        %v412 = vadd.f32 %v411, %v397
        %v413 = vadd.f32 %v412, %v398
        %v414 = vadd.f32 %v413, %v399
        %v415 = vadd.f32 %v414, %v400
        %v416 = vadd.f32 %v415, %v401
        %v417 = vadd.f32 %v416, %v402
        %v418 = vadd.f32 %v417, %v403
        %v419 = vadd.f32 %v418, %v404
        %v420 = vadd.f32 %v419, %v405
        %v421 = vadd.f32 %v420, %v406
        %v422 = vadd.f32 %v421, %v407
        %v423 = vadd.f32 %v422, %v408
        %v424 = vrot.slane %v423, 4
        %v425 = vadd.f32 %v423, %v424
        %v426 = vrot.slane %v425, 2
        %v427 = vadd.f32 %v425, %v426
        %v428 = vrot.slane %v427, 1
        %v429 = vadd.f32 %v427, %v428
        %v430 = vrcp.pop %v325
        %v431 = vmul.f32 %v429, %v430
        %v432 = vld [vmem:[%s2] sm:$0xff]
        %v433 = vld [vmem:[%s2 + $0x8] sm:$0xff]
        %v434 = vld [vmem:[%s2 + $0x10] sm:$0xff]
        %v435 = vld [vmem:[%s2 + $0x18] sm:$0xff]
        %v436 = vld [vmem:[%s2 + $0x20] sm:$0xff]
        %v437 = vld [vmem:[%s2 + $0x28] sm:$0xff]
        %v438 = vld [vmem:[%s2 + $0x30] sm:$0xff]
        %v439 = vld [vmem:[%s2 + $0x38] sm:$0xff]
        %v440 = vld [vmem:[%s2 + $0x40] sm:$0xff]
        %v441 = vld [vmem:[%s2 + $0x48] sm:$0xff]
        %v442 = vld [vmem:[%s2 + $0x50] sm:$0xff]
        %v443 = vld [vmem:[%s2 + $0x58] sm:$0xff]
        %v444 = vld [vmem:[%s2 + $0x60] sm:$0xff]
        %v445 = vld [vmem:[%s2 + $0x68] sm:$0xff]
        %v446 = vld [vmem:[%s2 + $0x70] sm:$0xff]
        %v447 = vld [vmem:[%s2 + $0x78] sm:$0xff]
        %v448 = vld [vmem:[%s3] sm:$0x1]
        %449 = vmatprep.subr.mxu0 0.0
        %450 = vmatpush1.msra.mxu0 %v447
        %451 = vmatprep.subr.mxu0 0.0
        %452 = vmatpush1.msra.mxu0 %v446
        %453 = vmatprep.subr.mxu0 0.0
        %454 = vmatpush1.msra.mxu0 %v445
        %455 = vmatprep.subr.mxu0 0.0
        %456 = vmatpush1.msra.mxu0 %v444
        %457 = vmatprep.subr.mxu0 0.0
        %458 = vmatpush1.msra.mxu0 %v443
        %459 = vmatprep.subr.mxu0 0.0
        %460 = vmatpush1.msra.mxu0 %v442
        %461 = vmatprep.subr.mxu0 0.0
        %462 = vmatpush1.msra.mxu0 %v441
        %463 = vmatprep.subr.mxu0 0.0
        %464 = vmatpush1.msra.mxu0 %v440
        %465 = vmatprep.subr.mxu0 0.0
        %466 = vmatpush1.msra.mxu0 %v439
        %467 = vmatprep.subr.mxu0 0.0
        %468 = vmatpush1.msra.mxu0 %v438
        %469 = vmatprep.subr.mxu0 0.0
        %470 = vmatpush1.msra.mxu0 %v437
        %471 = vmatprep.subr.mxu0 0.0
        %472 = vmatpush1.msra.mxu0 %v436
        %473 = vmatprep.subr.mxu0 0.0
        %474 = vmatpush1.msra.mxu0 %v435
        %475 = vmatprep.subr.mxu0 0.0
        %476 = vmatpush1.msra.mxu0 %v434
        %477 = vmatprep.subr.mxu0 0.0
        %478 = vmatpush1.msra.mxu0 %v433
        %479 = vmatprep.subr.mxu0 0.0
        %480 = vmatpush1.msra.mxu0 %v432
        %481 = vmatprep.subr.mxu0 0.0
        %482 = vmatpush2.msra.mxu0 0.0
        %483 = vmatprep.subr.mxu0 0.0
        %484 = vmatpush2.msra.mxu0 0.0
        %485 = vmatprep.subr.mxu0 0.0
        %486 = vmatpush2.msra.mxu0 0.0
        %487 = vmatprep.subr.mxu0 0.0
        %488 = vmatpush2.msra.mxu0 0.0
        %489 = vmatprep.subr.mxu0 0.0
        %490 = vmatpush2.msra.mxu0 0.0
        %491 = vmatprep.subr.mxu0 0.0
        %492 = vmatpush2.msra.mxu0 0.0
        %493 = vmatprep.subr.mxu0 0.0
        %494 = vmatpush2.msra.mxu0 0.0
        %495 = vmatprep.subr.mxu0 0.0
        %496 = vmatpush2.msra.mxu0 0.0
        %497 = vmatprep.subr.mxu0 0.0
        %498 = vmatpush2.msra.mxu0 0.0
        %499 = vmatprep.subr.mxu0 0.0
        %500 = vmatpush2.msra.mxu0 0.0
        %501 = vmatprep.subr.mxu0 0.0
        %502 = vmatpush2.msra.mxu0 0.0
        %503 = vmatprep.subr.mxu0 0.0
        %504 = vmatpush2.msra.mxu0 0.0
        %505 = vmatprep.subr.mxu0 0.0
        %506 = vmatpush2.msra.mxu0 0.0
        %507 = vmatprep.subr.mxu0 0.0
        %508 = vmatpush2.msra.mxu0 0.0
        %509 = vmatprep.subr.mxu0 0.0
        %510 = vmatpush2.msra.mxu0 0.0
        %511 = vmatprep.subr.mxu0 0.0
        %512 = vmatpush2.msra.mxu0 0.0
        %513 = vmatprep.mubr.f32.mxu0 0.0
        %514 = vmatmul.mubr.f32.gmra.mxu0 %v431
        %v515 = vpop.f32.mrf.mxu0
        %v516 = vadd.f32 %v448, %v515
        %v517 = vpop.f32.mrf.mxu0
        %518 = vdwg.mxu0
        %vm519 = vcmask 16384
        %v520 = vsel %vm519, %v516, -inf
        %521 = vmax.xlane.f32.xlu0 %v520
        %v522 = vpop.xlane.xlu0 %521
        %v523 = vsub.f32 %v516, %v522
        %v524 = vmul.f32 %v523, 1.442695
        %v525 = vpow.pop %v524
        %v526 = vsel %vm519, %v525, 0.0
        %527 = vadd.xlane.f32.xlu0 %v526
        %v528 = vpop.xlane.xlu0 %527
        %v529 = vrcp.pop %v528
        %v530 = vmul.f32 %v525, %v529
        %v531 = vld [vmem:[%s4] sm:$0x3]
        %v532 = vld [vmem:[%s4 + $0x2] sm:$0x3]
        %v533 = vld [vmem:[%s4 + $0x4] sm:$0x3]
        %s535 = vtos %v530
        %v536 = vstv %s535
        %v538 = vmul.f32 %v536, %v531
        %v539 = vadd.f32 %v538, 0.0
        %540 = vrot.lane.b32.xlu0 %v530, 127
        %v541 = vpop.permute.xlu0 %540
        %s542 = vtos %v541
        %v543 = vstv %s542
        %v545 = vmul.f32 %v543, %v532
        %v546 = vadd.f32 %v539, %v545
        %547 = vrot.lane.b32.xlu0 %v530, 126
        %v548 = vpop.permute.xlu0 %547
        %s549 = vtos %v548
        %v550 = vstv %s549
        %v552 = vmul.f32 %v550, %v533
        %v553 = vadd.f32 %v546, %v552
        %v554 = vrcp.pop 0.33
        %v555 = vmul.f32 %v553, %v554
        %v556 = vxor.u32 %v555, 2147483648
        %v557 = vmul.f32 %v556, 1.442695
        %v558 = vpow.pop %v557
        %v559 = vadd.f32 %v558, 1.0
        %v560 = vrcp.pop %v559
        %v561 = vmul.f32 1.0, %v560
        %vm562 = vcmp.gt.f32.partialorder %v561, 0.5
        %v563 = vsel %vm562, 1, 0
        %v564 = vcvt.s32.f32 %v563
        %v565 = vlaneseq
        %v566 = vand.u32 %v565, 127
        %vm567 = vcmp.eq.s32.totalorder %v566, 0
        %v568 = vld [vmem:[%s300] sm:$0x3]
        %570 = vset.pattern.permute.xlu0 0
        %571 = vperm.xlu0 %570, %v568
        %v572 = vpop.permute.xlu0 %571
        %v574 = vsel %vm567, %v572, %v564
        %575 = vst [vmem:[%s293] sm:$0x3] %v574
        %s576 = sand.u32 %s172, 1
        %s577 = scalar_lea.sflag [#allocation4], %s576
        %s578 = sand.u32 %s172, 1
        %s579 = smul.addr %s578, 2
        %s580 = scalar_lea.vmem [#allocation5], %s579
        // Predicated region
        $region49: #{tpu_custom_call.1} parent=43 // pred_check
          %p581 = pneg %p182
        $region50: #{tpu_custom_call.1} parent=43 // pred_check_branch
          %583 = sbr.rel (%p581) target = $region52
        $region51: #{tpu_custom_call.1} parent=43 // pred_region
          %s585 = ssub.s32 32, 32
          %586 = vsyncadd %s577, %s585
          %s587 = smul.addr %s23, 32
          %s588 = scalar_lea.hbm %s6, %s587
          %s590 = sshll.u32 %s580, 4
          %s591 = int_to_ptr.vmem [resolvable:$true] %s590
          %593 = dma.vmem_to_hbm [thread:$0]  %s591, 32, %s588, %s577
        $region52: #{tpu_custom_call.1} parent=43 // pred_fallthru
          _
      $region44: #{tpu_custom_call.1} parent=5 // pred_fallthru
        _
      %p594 = scmp.le.s32.totalorder 2, %s18
      // Predicated region
      $region53: #{tpu_custom_call.1} parent=5 // pred_check
        %p595 = pneg %p594
      $region54: #{tpu_custom_call.1} parent=5 // pred_check_branch
        %597 = sbr.rel (%p595) target = $region56
      $region55: #{tpu_custom_call.1} parent=5 // pred_region
        %s598 = ssub.s32 %s18, 2
        // Predicated region
        $region57: #{tpu_custom_call.1} parent=55 // pred_check
          %p599 = pneg %p188
        $region58: #{tpu_custom_call.1} parent=55 // pred_check_branch
          %601 = sbr.rel (%p599) target = $region60
        $region59: #{tpu_custom_call.1} parent=55 // pred_region
          %s602 = sand.u32 %s173, 1
          %s603 = scalar_lea.sflag [#allocation4], %s602
          %s604 = sand.u32 %s173, 1
          %s605 = smul.addr %s604, 2
          %s606 = scalar_lea.vmem [#allocation5], %s605
          %607 = dma.done %s603, 32
        $region60: #{tpu_custom_call.1} parent=55 // pred_fallthru
          _
      $region56: #{tpu_custom_call.1} parent=5 // pred_fallthru
        _
    $region6: #{tpu_custom_call.1} parent=1 // loop_footer
      %s22 = sadd.s32 1, %s18
    $region7: #{tpu_custom_call.1} parent=1 // loop_footer_branch
      %17 = sbr.rel target = $region3
    $region8: #{tpu_custom_call.1} parent=1 // loop_exit
      _
    %608 = vsyncpa [#allocation3], 1
    %s609 = scalar_lea.sflag [#allocation3], 1
    %610 = vsyncpa %s609, 1
    %611 = vsyncpa [#allocation4], 1
    %s612 = scalar_lea.sflag [#allocation4], 1
    %613 = vsyncpa %s612, 1

</llo_original>
